<compile_context>
chip_gen: v7x
topology: tpu7x:2x2x1
jax: 0.10.0
libtpu: 0.0.40
codegen_flags: <defaults>
</compile_context>

<pallas_src>
import math
import functools

import jax
import jax.numpy as jnp
from jax import lax
from jax.experimental import pallas as pl
from jax.experimental.pallas import tpu as pltpu

DIM = 1  # matches `dim = 1` in the PyTorch script

# ---- static sizing knobs ----------------------------------------------------
_SMALL_N_BYTES = 2 << 20    # keep x2[b] fully resident in VMEM below this size
_VMEM_TARGET = 28 << 20     # stay under the most restrictive scoped-VMEM budget
_SUBLANE = 8


def _round_up(x, m):
    return (x + m - 1) // m * m


def _pad_axis(x, axis, new_size):
    pad = new_size - x.shape[axis]
    if pad == 0:
        return x
    widths = [(0, 0)] * x.ndim
    widths[axis] = (0, pad)
    return jnp.pad(x, widths)


# -----------------------------------------------------------------------------
# Path A: x2[b] resident in VMEM, plain softmax.  grid = (B, M_tiles)
# -----------------------------------------------------------------------------
def _sdpa_resident_kernel(x1_ref, x2_ref, o_ref, *, scale, precision):
    x1 = x1_ref[...]                      # (tm, K)
    x2 = x2_ref[...]                      # (N,  K) -- resident for the batch

    # scores: x1 @ x2^T, contracting the shared K axis (no transpose in-kernel)
    s = lax.dot_general(
        x1, x2, dimension_numbers=(((1,), (1,)), ((), ())),
        precision=precision, preferred_element_type=jnp.float32)
    if scale != 1.0:                      # dim == 1 -> scale == 1.0: skip
        s = s * scale

    m = jnp.max(s, axis=-1, keepdims=True)
    p = jnp.exp(s - m)
    l = jnp.sum(p, axis=-1, keepdims=True)
    p = p / l                             # exact divide, once per tile

    o_ref[...] = jnp.dot(
        p.astype(x2.dtype), x2,
        precision=precision, preferred_element_type=jnp.float32,
    ).astype(o_ref.dtype)


# -----------------------------------------------------------------------------
# Path B: flash-style online softmax, N streamed innermost.
# grid = (B, M_tiles, N_tiles)
# -----------------------------------------------------------------------------
def _sdpa_flash_kernel(x1_ref, x2_ref, o_ref, m_sc, l_sc, acc_sc,
                       *, scale, precision, n_valid, tn):
    nj = pl.program_id(2)

    @pl.when(nj == 0)
    def _init():
        m_sc[...] = jnp.full(m_sc.shape, -jnp.inf, dtype=m_sc.dtype)
        l_sc[...] = jnp.zeros(l_sc.shape, dtype=l_sc.dtype)
        acc_sc[...] = jnp.zeros(acc_sc.shape, dtype=acc_sc.dtype)

    x1 = x1_ref[...]                      # (tm, K)
    x2 = x2_ref[...]                      # (tn, K)

    s = lax.dot_general(
        x1, x2, dimension_numbers=(((1,), (1,)), ((), ())),
        precision=precision, preferred_element_type=jnp.float32)
    if scale != 1.0:
        s = s * scale

    if n_valid % tn != 0:
        # last N tile is zero-padded: mask padded key columns out of the softmax
        col = nj * tn + lax.broadcasted_iota(jnp.int32, s.shape, 1)
        s = jnp.where(col < n_valid, s, -jnp.inf)

    m_prev = m_sc[...]
    m_new = jnp.maximum(m_prev, jnp.max(s, axis=-1, keepdims=True))
    alpha = jnp.exp(m_prev - m_new)
    p = jnp.exp(s - m_new)
    l_sc[...] = alpha * l_sc[...] + jnp.sum(p, axis=-1, keepdims=True)
    acc_sc[...] = alpha * acc_sc[...] + jnp.dot(
        p.astype(x2.dtype), x2,
        precision=precision, preferred_element_type=jnp.float32)
    m_sc[...] = m_new

    @pl.when(nj == pl.num_programs(2) - 1)
    def _finalize():
        # exact divide: runs once per output tile, approx reciprocal buys nothing
        o_ref[...] = (acc_sc[...] / l_sc[...]).astype(o_ref.dtype)


# -----------------------------------------------------------------------------
# Wrapper
# -----------------------------------------------------------------------------
def sdpa_model(x1, x2, dim=DIM, *, tn=None, use_bf16_matmul=False,
               force_flash=False):
    """x1: (B, M, K), x2: (B, N, K) -> (B, M, K)."""
    B, M, K = x1.shape
    B2, N, K2 = x2.shape
    assert B == B2 and K == K2, "batch / feature dims must match"

    orig_dtype = x1.dtype
    scale = 1.0 / math.sqrt(float(dim))

    if use_bf16_matmul:
        # MXU-native bf16 inputs, f32 accumulation (perf option, looser precision)
        x1 = x1.astype(jnp.bfloat16)
        x2 = x2.astype(jnp.bfloat16)
        mm_precision = None
    else:
        # fp32 MXU contraction so results track the f32 PyTorch reference
        mm_precision = jax.lax.Precision.HIGHEST
    esize = jnp.dtype(x1.dtype).itemsize

    # ---- M tiling: cap the query tile at 128 rows; pad M to a tile multiple
    tm = _round_up(M, _SUBLANE) if M <= 128 else 128

    # ---- path selection: keep x2[b] resident when it comfortably fits VMEM
    resident_bytes = (2 * tm * K + 2 * N * K + 2 * tm * K) * esize
    use_resident = (not force_flash
                    and N * K * esize <= _SMALL_N_BYTES
                    and resident_bytes <= _VMEM_TARGET)

    if use_resident:
        m_pad = _round_up(M, tm)
        x1p = _pad_axis(x1, 1, m_pad)
        grid_m = m_pad // tm

        kernel = functools.partial(
            _sdpa_resident_kernel, scale=scale, precision=mm_precision)
        out = pl.pallas_call(
            kernel,
            out_shape=jax.ShapeDtypeStruct((B, m_pad, K), orig_dtype),
            grid_spec=pltpu.PrefetchScalarGridSpec(
                num_scalar_prefetch=0,
                grid=(B, grid_m),
                in_specs=[
                    pl.BlockSpec((None, tm, K), lambda b, i: (b, i, 0)),
                    # full (N, K) block, invariant in i -> DMA'd once per batch
                    pl.BlockSpec((None, N, K), lambda b, i: (b, 0, 0)),
                ],
                out_specs=pl.BlockSpec((None, tm, K), lambda b, i: (b, i, 0)),
            ),
            compiler_params=pltpu.CompilerParams(
                dimension_semantics=("parallel", "parallel"),
            ),
        )(x1p, x2)
    else:
        if tn is None:
            tn = 128  # v5e-safe default; 256 is often better on v6e/v7x

        def footprint(tm_, tn_):
            return ((2 * tm_ * K + 2 * tn_ * K + 2 * tm_ * K) * esize  # dbl bufs
                    + tm_ * K * 4 + 2 * tm_ * 4)                        # scratch

        # VMEM-aware shrink (v7x has only 64 MiB physical / 32 MiB default scoped)
        while tn > _SUBLANE and footprint(tm, tn) > _VMEM_TARGET:
            tn //= 2
        while tm > _SUBLANE and footprint(tm, tn) > _VMEM_TARGET:
            tm //= 2
        # TODO(synk): tile K as well if a single (tile, K) slab still overflows.

        m_pad = _round_up(M, tm)
        x1p = _pad_axis(x1, 1, m_pad)
        grid_m = m_pad // tm
        n_pad = _round_up(N, tn)
        x2p = _pad_axis(x2, 1, n_pad)
        grid_n = n_pad // tn

        est = footprint(tm, tn)
        vmem_limit = int(min(max(2 * est, 32 << 20), 48 << 20)) \
            if est > (12 << 20) else None

        kernel = functools.partial(
            _sdpa_flash_kernel, scale=scale, precision=mm_precision,
            n_valid=N, tn=tn)
        out = pl.pallas_call(
            kernel,
            out_shape=jax.ShapeDtypeStruct((B, m_pad, K), orig_dtype),
            grid_spec=pltpu.PrefetchScalarGridSpec(
                num_scalar_prefetch=0,
                grid=(B, grid_m, grid_n),
                in_specs=[
                    # x1 tile: invariant along N -> stays resident
                    pl.BlockSpec((None, tm, K), lambda b, i, j: (b, i, 0)),
                    # x2 tile: streamed along the innermost N axis
                    pl.BlockSpec((None, tn, K), lambda b, i, j: (b, j, 0)),
                ],
                out_specs=pl.BlockSpec((None, tm, K), lambda b, i, j: (b, i, 0)),
                scratch_shapes=[
                    pltpu.VMEM((tm, 1), jnp.float32),   # running row max
                    pltpu.VMEM((tm, 1), jnp.float32),   # running denominator
                    pltpu.VMEM((tm, K), jnp.float32),   # weighted-V accumulator
                ],
            ),
            compiler_params=pltpu.CompilerParams(
                dimension_semantics=("parallel", "parallel", "arbitrary"),
                vmem_limit_bytes=vmem_limit,
            ),
        )(x1p, x2p)

    if out.shape[1] != M:
        out = out[:, :M, :]
    return out


def sdpa_reference(x1, x2, dim=DIM):
    hi = jax.lax.Precision.HIGHEST
    qk = jnp.einsum("bmk,bnk->bmn", x1, x2, precision=hi)
    scaled = qk / math.sqrt(float(dim))
    soft = jax.nn.softmax(scaled, axis=-1)
    return jnp.einsum("bmn,bnk->bmk", soft, x2, precision=hi)


def _assert_close(out, ref, name):
    err = float(jnp.max(jnp.abs(out - ref)))
    assert jnp.allclose(out, ref, atol=2e-3, rtol=2e-3), \
        f"{name}: mismatch, max abs err = {err}"


if __name__ == "__main__":
    key = jax.random.PRNGKey(0)
    k1, k2, k3, k4, k5, k6 = jax.random.split(key, 6)

    # 1) Small shapes consistent with the module's batched x1 @ x2^T
    #    (resident-x2 path, full-extent tiles).
    B, M, N, K = 2, 16, 24, 32
    x1 = jax.random.normal(k1, (B, M, K), dtype=jnp.float32)
    x2 = jax.random.normal(k2, (B, N, K), dtype=jnp.float32)
    out = sdpa_model(x1, x2)
    jax.block_until_ready(out)
    assert out.shape == (B, M, K)
    _assert_close(out, sdpa_reference(x1, x2), "small/resident")

    # 2) Lane-dense shapes, resident-x2 path with M tiled at 128.
    Bb, Mb, Nb, Kb = 2, 256, 384, 128
    y1 = jax.random.normal(k3, (Bb, Mb, Kb), dtype=jnp.float32)
    y2 = jax.random.normal(k4, (Bb, Nb, Kb), dtype=jnp.float32)
    out2 = sdpa_model(y1, y2)
    jax.block_until_ready(out2)
    assert out2.shape == (Bb, Mb, Kb)
    ref2 = sdpa_reference(y1, y2)
    _assert_close(out2, ref2, "large/resident")

    # 3) Same data through the flash (online-softmax) path.
    out3 = sdpa_model(y1, y2, force_flash=True)
    jax.block_until_ready(out3)
    _assert_close(out3, ref2, "large/flash")

    # 4) Non-divisible M and N: exercises wrapper padding (resident) and
    #    padded + masked partial N tiles (flash).
    Bc, Mc, Nc, Kc = 1, 200, 300, 128
    z1 = jax.random.normal(k5, (Bc, Mc, Kc), dtype=jnp.float32)
    z2 = jax.random.normal(k6, (Bc, Nc, Kc), dtype=jnp.float32)
    refz = sdpa_reference(z1, z2)
    outz_a = sdpa_model(z1, z2)
    jax.block_until_ready(outz_a)
    assert outz_a.shape == (Bc, Mc, Kc)
    _assert_close(outz_a, refz, "ragged/resident")
    outz_b = sdpa_model(z1, z2, force_flash=True)
    jax.block_until_ready(outz_b)
    assert outz_b.shape == (Bc, Mc, Kc)
    _assert_close(outz_b, refz, "ragged/flash")

    print("KERNEL_OK")
</pallas_src>

<mosaic_0001>
module attributes {stable_mosaic.version = 11 : i64} {
  func.func @_sdpa_resident_kernel(%arg0: i32, %arg1: i32, %arg2: memref<1x16x32xf32, #tpu.memory_space<vmem>>, %arg3: memref<1x24x32xf32, #tpu.memory_space<vmem>>, %arg4: memref<1x16x32xf32, #tpu.memory_space<vmem>>) attributes {dimension_semantics = [#tpu.dimension_semantics<parallel>, #tpu.dimension_semantics<parallel>], iteration_bounds = array<i64: 2, 1>, scalar_prefetch = 0 : i64, scratch_operands = 0 : i64, tpu.core_type = #tpu.core_type<tc>, window_params = [{transform_indices = @transform_0, window_bounds = array<i64: 1, 16, 32>}, {transform_indices = @transform_1, window_bounds = array<i64: 1, 24, 32>}, {transform_indices = @transform_2, window_bounds = array<i64: 1, 16, 32>}]} {
    %c0 = arith.constant 0 : index
    %c0_0 = arith.constant 0 : index
    %c0_1 = arith.constant 0 : index
    %0 = vector.load %arg2[%c0, %c0_0, %c0_1] : memref<1x16x32xf32, #tpu.memory_space<vmem>>, vector<1x16x32xf32>
    %1 = vector.shape_cast %0 : vector<1x16x32xf32> to vector<16x32xf32>
    %c0_2 = arith.constant 0 : index
    %c0_3 = arith.constant 0 : index
    %c0_4 = arith.constant 0 : index
    %2 = vector.load %arg3[%c0_2, %c0_3, %c0_4] : memref<1x24x32xf32, #tpu.memory_space<vmem>>, vector<1x24x32xf32>
    %3 = vector.shape_cast %2 : vector<1x24x32xf32> to vector<24x32xf32>
    %cst = arith.constant dense<0.000000e+00> : vector<16x24xf32>
    %4 = tpu.matmul %1, %3, %cst {dimension_numbers = #tpu.dot_dimension_numbers<[1], [1], [0], [0], [0, 0, 1, 0], [], []>, precision = #tpu.contract_precision<fp32>} : vector<16x32xf32>, vector<24x32xf32>, vector<16x24xf32> -> vector<16x24xf32>
    %cst_5 = arith.constant dense<0xFF800000> : vector<16xf32>
    %5 = vector.multi_reduction <maximumf>, %4, %cst_5 [1] : vector<16x24xf32> to vector<16xf32>
    %6 = vector.shape_cast %5 : vector<16xf32> to vector<16x1xf32>
    %7 = vector.broadcast %6 : vector<16x1xf32> to vector<16x24xf32>
    %8 = arith.subf %4, %7 : vector<16x24xf32>
    %9 = math.exp %8 : vector<16x24xf32>
    %cst_6 = arith.constant dense<0.000000e+00> : vector<16xf32>
    %10 = vector.multi_reduction <add>, %9, %cst_6 [1] : vector<16x24xf32> to vector<16xf32>
    %11 = vector.shape_cast %10 : vector<16xf32> to vector<16x1xf32>
    %12 = vector.broadcast %11 : vector<16x1xf32> to vector<16x24xf32>
    %13 = arith.divf %9, %12 : vector<16x24xf32>
    %cst_7 = arith.constant dense<0.000000e+00> : vector<16x32xf32>
    %14 = tpu.matmul %13, %3, %cst_7 {dimension_numbers = #tpu.dot_dimension_numbers<[1], [0], [0], [1], [0, 0, 1, 1], [], []>, precision = #tpu.contract_precision<fp32>} : vector<16x24xf32>, vector<24x32xf32>, vector<16x32xf32> -> vector<16x32xf32>
    %c0_8 = arith.constant 0 : index
    %c0_9 = arith.constant 0 : index
    %c0_10 = arith.constant 0 : index
    %15 = vector.load %arg4[%c0_8, %c0_9, %c0_10] : memref<1x16x32xf32, #tpu.memory_space<vmem>>, vector<1x16x32xf32>
    %16 = vector.shape_cast %15 : vector<1x16x32xf32> to vector<16x32xf32>
    %17 = vector.shape_cast %14 : vector<16x32xf32> to vector<1x16x32xf32>
    tpu.vector_store %arg4[%c0_8, %c0_9, %c0_10], %17 {strides = array<i32>} : memref<1x16x32xf32, #tpu.memory_space<vmem>>, vector<1x16x32xf32>,
    return
  }
  func.func @transform_0(%arg0: i32, %arg1: i32) -> (i32, i32, i32) {
    %c0_i32 = arith.constant 0 : i32
    %c0_i32_0 = arith.constant 0 : i32
    return %arg0, %arg1, %c0_i32 : i32, i32, i32
  }
  func.func @transform_1(%arg0: i32, %arg1: i32) -> (i32, i32, i32) {
    %c0_i32 = arith.constant 0 : i32
    %c0_i32_0 = arith.constant 0 : i32
    %c0_i32_1 = arith.constant 0 : i32
    return %arg0, %c0_i32, %c0_i32_0 : i32, i32, i32
  }
  func.func @transform_2(%arg0: i32, %arg1: i32) -> (i32, i32, i32) {
    %c0_i32 = arith.constant 0 : i32
    %c0_i32_0 = arith.constant 0 : i32
    return %arg0, %arg1, %c0_i32 : i32, i32, i32
  }
}

</mosaic_0001>

<llo_original>
// kernel: tpu_custom_call.1
$region0: #{tpu_custom_call.1}
  #allocation0 [shape = 'u32[]', space=smem, size = 0x4, offset = 0x4, fixed_abs, tag = 'smem constant byte address 0x4 - core index']
  #allocation1 [shape = 'u32[144,128]{1,0:T(1,128)}', space=vmem, size = 0x12000, scoped, tag = 'internal scratch']
  %s0 = inlined_call_operand.hbm [shape: f32[2,16,32], index: 0, kind: input, shape index: {}]
  %s1 = inlined_call_operand.hbm [shape: f32[2,24,32], index: 1, kind: input, shape index: {}]
  %s2 = inlined_call_operand.hbm [shape: f32[2,16,32], index: 2, kind: output, shape index: {}]
  %s3 = sld [smem:[#allocation0]]
  $region49: #{tpu_custom_call.1} parent=0
    _
  %s5 = ssub.s32 1, %s3
  %s6 = scalar_select 0, %s5, %s3
  $region1: #{tpu_custom_call.1} parent=0
    #allocation2 [shape = 'u8[16384]{0}', space=vmem, size = 0x4000, scoped, tag = 'input window, operand 0']
    #allocation3 [shape = 's32[2]{0}', space=sflag, size = 0x8, scoped, tag = 'scoped memory for tpu_custom_call.1']
    #allocation4 [shape = 's32[2]{0}', space=sflag, size = 0x8, scoped, tag = 'scoped memory for tpu_custom_call.1']
    #allocation5 [shape = 'u8[24576]{0}', space=vmem, size = 0x6000, scoped, tag = 'input window, operand 1']
    #allocation6 [shape = 's32[2]{0}', space=sflag, size = 0x8, scoped, tag = 'scoped memory for tpu_custom_call.1']
    #allocation7 [shape = 'u8[16384]{0}', space=vmem, size = 0x4000, scoped, tag = 'output window, operand 0']
    %7 = vsyncpa [#allocation3], 0
    %s8 = scalar_lea.sflag [#allocation3], 1
    %9 = vsyncpa %s8, 0
    %10 = vsyncpa [#allocation6], 0
    %s11 = scalar_lea.sflag [#allocation6], 1
    %12 = vsyncpa %s11, 0
    %13 = vsyncpa [#allocation4], 0
    %s14 = scalar_lea.sflag [#allocation4], 1
    %15 = vsyncpa %s14, 0
    loop: start=0, step=1, limit=4
    $region2: #{tpu_custom_call.1} parent=1 // loop_pre_header
      _
    $region3: #{tpu_custom_call.1} parent=1 // loop_header
      %s17 = sphi 0, %s21
      %p18 = scmp.ge.s32.totalorder %s17, 4
      %s24 = sphi 0, %s36
      %s25 = sphi 0, %s32
      %s26 = sphi 0, %s24
      %s27 = sphi 0, %s25
      %s28 = sphi 0, %s26
      %s29 = sphi 0, %s27
      %s41 = sphi 0, %s43
      %s44 = sphi 0, %s41
      %s45 = sphi 0, %s44
      %s61 = sphi 0, %s45
      %s67 = sphi 0, %s69
      %s70 = sphi 0, %s67
      %s71 = sphi 0, %s70
      %s87 = sphi 0, %s71
      %s95 = sphi 0, %s97
      %s98 = sphi 0, %s95
      %s99 = sphi 0, %s98
      %s115 = sphi 0, %s99
    $region4: #{tpu_custom_call.1} parent=1 // loop_header_branch
      %20 = sbr.rel (%p18) target = $region8
    $region5: #{tpu_custom_call.1} parent=1 // loop_body
      %s22 = ssub.s32 %s17, 1
      %s23 = ssub.s32 %s17, 2
      %s30 = sadd.s32 1, %s25
      %p31 = scmp.ge.s32.totalorder %s30, 1
      %s32 = scalar_select %p31, 0, %s30
      %s33 = sadd.s32 1, %s24
      %s34 = scalar_select %p31, %s33, %s24
      %p35 = scmp.ge.s32.totalorder %s34, 2
      %s36 = scalar_select %p35, 0, %s34
      %s37 = ssub.s32 %s24, %s36
      %s38 = ssub.s32 %s25, %s32
      %s39 = sor.u32 %s37, %s38
      %p40 = scmp.eq.s32.totalorder %s39, 0
      %s42 = sadd.s32 %s41, 1
      %s43 = scalar_select %p40, %s41, %s42
      %p46 = pneg %p40
      %p47 = scmp.eq.s32.totalorder %s17, 1
      %p48 = por %p46, %p47
      %p49 = scmp.ne.s32.totalorder %s41, %s44
      %p50 = scmp.eq.s32.totalorder %s17, 0
      %p51 = por %p49, %p50
      %p52 = scmp.ne.s32.totalorder %s41, %s44
      %p53 = scmp.eq.s32.totalorder %s22, 1
      %p54 = por %p52, %p53
      %p55 = scmp.ne.s32.totalorder %s44, %s45
      %p56 = scmp.eq.s32.totalorder %s22, 0
      %p57 = por %p55, %p56
      %p58 = scmp.ne.s32.totalorder %s44, %s45
      %p59 = scmp.eq.s32.totalorder %s23, 1
      %p60 = por %p58, %p59
      %p62 = scmp.ne.s32.totalorder %s45, %s61
      %p63 = scmp.eq.s32.totalorder %s23, 0
      %p64 = por %p62, %p63
      %s65 = ssub.s32 %s24, %s36
      %p66 = scmp.eq.s32.totalorder %s65, 0
      %s68 = sadd.s32 %s67, 1
      %s69 = scalar_select %p66, %s67, %s68
      %p72 = pneg %p66
      %p73 = scmp.eq.s32.totalorder %s17, 1
      %p74 = por %p72, %p73
      %p75 = scmp.ne.s32.totalorder %s67, %s70
      %p76 = scmp.eq.s32.totalorder %s17, 0
      %p77 = por %p75, %p76
      %p78 = scmp.ne.s32.totalorder %s67, %s70
      %p79 = scmp.eq.s32.totalorder %s22, 1
      %p80 = por %p78, %p79
      %p81 = scmp.ne.s32.totalorder %s70, %s71
      %p82 = scmp.eq.s32.totalorder %s22, 0
      %p83 = por %p81, %p82
      %p84 = scmp.ne.s32.totalorder %s70, %s71
      %p85 = scmp.eq.s32.totalorder %s23, 1
      %p86 = por %p84, %p85
      %p88 = scmp.ne.s32.totalorder %s71, %s87
      %p89 = scmp.eq.s32.totalorder %s23, 0
      %p90 = por %p88, %p89
      %s91 = ssub.s32 %s24, %s36
      %s92 = ssub.s32 %s25, %s32
      %s93 = sor.u32 %s91, %s92
      %p94 = scmp.eq.s32.totalorder %s93, 0
      %s96 = sadd.s32 %s95, 1
      %s97 = scalar_select %p94, %s95, %s96
      %p100 = pneg %p94
      %p101 = scmp.eq.s32.totalorder %s17, 1
      %p102 = por %p100, %p101
      %p103 = scmp.ne.s32.totalorder %s95, %s98
      %p104 = scmp.eq.s32.totalorder %s17, 0
      %p105 = por %p103, %p104
      %p106 = scmp.ne.s32.totalorder %s95, %s98
      %p107 = scmp.eq.s32.totalorder %s22, 1
      %p108 = por %p106, %p107
      %p109 = scmp.ne.s32.totalorder %s98, %s99
      %p110 = scmp.eq.s32.totalorder %s22, 0
      %p111 = por %p109, %p110
      %p112 = scmp.ne.s32.totalorder %s98, %s99
      %p113 = scmp.eq.s32.totalorder %s23, 1
      %p114 = por %p112, %p113
      %p116 = scmp.ne.s32.totalorder %s99, %s115
      %p117 = scmp.eq.s32.totalorder %s23, 0
      %p118 = por %p116, %p117
      %p119 = scmp.le.s32.totalorder 1, %s17
      %p120 = scmp.lt.s32.totalorder %s17, 3
      %p121 = pnand %p119, %p120
      %p122 = pneg %p121
      // Predicated region
      $region9: #{tpu_custom_call.1} parent=5 // pred_check
        _
      $region10: #{tpu_custom_call.1} parent=5 // pred_check_branch
        %124 = sbr.rel (%p121) target = $region12
      $region11: #{tpu_custom_call.1} parent=5 // pred_region
        %s125 = ssub.s32 %s17, 1
      $region12: #{tpu_custom_call.1} parent=5 // pred_fallthru
        _
      %p126 = scmp.lt.s32.totalorder %s17, 2
      // Predicated region
      $region13: #{tpu_custom_call.1} parent=5 // pred_check
        %p127 = pneg %p126
      $region14: #{tpu_custom_call.1} parent=5 // pred_check_branch
        %129 = sbr.rel (%p127) target = $region16
      $region15: #{tpu_custom_call.1} parent=5 // pred_region
        // Predicated region
        $region17: #{tpu_custom_call.1} parent=15 // pred_check
          %p130 = pneg %p51
        $region18: #{tpu_custom_call.1} parent=15 // pred_check_branch
          %132 = sbr.rel (%p130) target = $region20
        $region19: #{tpu_custom_call.1} parent=15 // pred_region
          %s133 = sand.u32 %s41, 1
          %s134 = scalar_lea.sflag [#allocation3], %s133
          %s135 = sand.u32 %s41, 1
          %s136 = smul.addr %s135, 16
          %s137 = scalar_lea.vmem [#allocation2], %s136
          %s138 = smul.u32 2, %s25
          %s140 = ssub.s32 256, 256
          %141 = vsyncadd %s134, %s140
          %s142 = smul.addr %s24, 2
          %s143 = sadd.s32 %s138, %s142
          %s144 = smul.addr %s143, 128
          %s145 = scalar_lea.hbm %s0, %s144
          %s146 = sshll.u32 %s137, 4
          %s147 = int_to_ptr.vmem [resolvable:$true] %s146
          %152 = dma.hbm_to_vmem [thread:$0]  %s145, 256, %s147, %s134, 128, 128, 8
        $region20: #{tpu_custom_call.1} parent=15 // pred_fallthru
          _
        // Predicated region
        $region21: #{tpu_custom_call.1} parent=15 // pred_check
          %p153 = pneg %p77
        $region22: #{tpu_custom_call.1} parent=15 // pred_check_branch
          %155 = sbr.rel (%p153) target = $region24
        $region23: #{tpu_custom_call.1} parent=15 // pred_region
          %s156 = sand.u32 %s67, 1
          %s157 = scalar_lea.sflag [#allocation6], %s156
          %s158 = sand.u32 %s67, 1
          %s159 = smul.addr %s158, 24
          %s160 = scalar_lea.vmem [#allocation5], %s159
          %s162 = ssub.s32 384, 384
          %163 = vsyncadd %s157, %s162
          %s164 = smul.addr %s24, 3
          %s165 = smul.addr %s164, 128
          %s166 = scalar_lea.hbm %s1, %s165
          %s167 = sshll.u32 %s160, 4
          %s168 = int_to_ptr.vmem [resolvable:$true] %s167
          %173 = dma.hbm_to_vmem [thread:$0]  %s166, 384, %s168, %s157, 128, 128, 8
        $region24: #{tpu_custom_call.1} parent=15 // pred_fallthru
          _
      $region16: #{tpu_custom_call.1} parent=5 // pred_fallthru
        _
      %p174 = scmp.le.s32.totalorder 1, %s17
      %p175 = scmp.lt.s32.totalorder %s17, 3
      %p176 = pnand %p174, %p175
      %p177 = pneg %p176
      // Predicated region
      $region25: #{tpu_custom_call.1} parent=5 // pred_check
        _
      $region26: #{tpu_custom_call.1} parent=5 // pred_check_branch
        %179 = sbr.rel (%p176) target = $region28
      $region27: #{tpu_custom_call.1} parent=5 // pred_region
        %s180 = ssub.s32 %s17, 1
        %s181 = sand.u32 %s44, 1
        %s182 = scalar_lea.sflag [#allocation3], %s181
        %s183 = sand.u32 %s44, 1
        %s184 = smul.addr %s183, 16
        %s185 = scalar_lea.vmem [#allocation2], %s184
        // Predicated region
        $region29: #{tpu_custom_call.1} parent=27 // pred_check
          %p186 = pneg %p57
        $region30: #{tpu_custom_call.1} parent=27 // pred_check_branch
          %188 = sbr.rel (%p186) target = $region32
        $region31: #{tpu_custom_call.1} parent=27 // pred_region
          %189 = dma.done %s182, 256
        $region32: #{tpu_custom_call.1} parent=27 // pred_fallthru
          _
        %s190 = sand.u32 %s70, 1
        %s191 = scalar_lea.sflag [#allocation6], %s190
        %s192 = sand.u32 %s70, 1
        %s193 = smul.addr %s192, 24
        %s194 = scalar_lea.vmem [#allocation5], %s193
        // Predicated region
        $region33: #{tpu_custom_call.1} parent=27 // pred_check
          %p195 = pneg %p83
        $region34: #{tpu_custom_call.1} parent=27 // pred_check_branch
          %197 = sbr.rel (%p195) target = $region36
        $region35: #{tpu_custom_call.1} parent=27 // pred_region
          %198 = dma.done %s191, 384
        $region36: #{tpu_custom_call.1} parent=27 // pred_fallthru
          _
        %s199 = sand.u32 %s44, 1
        %s200 = scalar_lea.sflag [#allocation3], %s199
        %s201 = sand.u32 %s44, 1
        %s202 = smul.addr %s201, 16
        %s203 = scalar_lea.vmem [#allocation2], %s202
        %p204 = pneg %p57
        %p205 = pneg %p54
        %s206 = sand.u32 %s70, 1
        %s207 = scalar_lea.sflag [#allocation6], %s206
        %s208 = sand.u32 %s70, 1
        %s209 = smul.addr %s208, 24
        %s210 = scalar_lea.vmem [#allocation5], %s209
        %p211 = pneg %p83
        %p212 = pneg %p80
        %p213 = pneg %p111
        %p214 = pneg %p108
        %s215 = sand.u32 %s98, 1
        %s216 = scalar_lea.sflag [#allocation4], %s215
        %s217 = sand.u32 %s98, 1
        %s218 = smul.addr %s217, 16
        %s219 = scalar_lea.vmem [#allocation7], %s218
        %s220 = smul.u32 2, %s27
        %s221 = smul.u32 2, %s27
        %v222 = vld [vmem:[%s185] sm:$0xff]
        %v223 = vld [vmem:[%s185 + $0x8] sm:$0xff]
        %v224 = vld [vmem:[%s194] sm:$0xff]
        %v225 = vld [vmem:[%s194 + $0x8] sm:$0xff]
        %v226 = vld [vmem:[%s194 + $0x10] sm:$0xff]
        %vm227 = vcmask 261120
        %v229 = vsel %vm227, %v222, 0
        %v232 = vsel %vm227, %v223, 0
        %v235 = vsel %vm227, %v224, 0
        %v238 = vsel %vm227, %v225, 0
        %v241 = vsel %vm227, %v226, 0
        %243 = vmatprep.subr.mxu0 0.0
        %v244 = vand.u32 %v235, 4294901760
        %245 = vmatpush1.xpose.msra.mxu0 %v244
        %246 = vmatprep.subr.mxu0 0.0
        %v247 = vand.u32 %v238, 4294901760
        %248 = vmatpush1.xpose.msra.mxu0 %v247
        %249 = vmatprep.subr.mxu0 0.0
        %v250 = vand.u32 %v241, 4294901760
        %251 = vmatpush1.xpose.msra.mxu0 %v250
        %252 = vmatprep.subr.mxu0 0.0
        %253 = vmatpush1.xpose.msra.mxu0 0.0
        %254 = vmatprep.subr.mxu0 0.0
        %255 = vmatpush1.xpose.msra.mxu0 0.0
        %256 = vmatprep.subr.mxu0 0.0
        %257 = vmatpush1.xpose.msra.mxu0 0.0
        %258 = vmatprep.subr.mxu0 0.0
        %259 = vmatpush1.xpose.msra.mxu0 0.0
        %260 = vmatprep.subr.mxu0 0.0
        %261 = vmatpush1.xpose.msra.mxu0 0.0
        %262 = vmatprep.subr.mxu0 0.0
        %263 = vmatpush1.xpose.msra.mxu0 0.0
        %264 = vmatprep.subr.mxu0 0.0
        %265 = vmatpush1.xpose.msra.mxu0 0.0
        %266 = vmatprep.subr.mxu0 0.0
        %267 = vmatpush1.xpose.msra.mxu0 0.0
        %268 = vmatprep.subr.mxu0 0.0
        %269 = vmatpush1.xpose.msra.mxu0 0.0
        %270 = vmatprep.subr.mxu0 0.0
        %271 = vmatpush1.xpose.msra.mxu0 0.0
        %272 = vmatprep.subr.mxu0 0.0
        %273 = vmatpush1.xpose.msra.mxu0 0.0
        %274 = vmatprep.subr.mxu0 0.0
        %275 = vmatpush1.xpose.msra.mxu0 0.0
        %276 = vmatprep.subr.mxu0 0.0
        %277 = vmatpush1.xpose.msra.mxu0 0.0
        %278 = vmatprep.subr.mxu0 0.0
        %279 = vmatpush1.xpose.msra.mxu0 0.0
        %280 = vmatprep.subr.mxu0 0.0
        %281 = vmatpush1.xpose.msra.mxu0 0.0
        %282 = vmatprep.subr.mxu0 0.0
        %283 = vmatpush1.xpose.msra.mxu0 0.0
        %284 = vmatprep.subr.mxu0 0.0
        %285 = vmatpush1.xpose.msra.mxu0 0.0
        %286 = vmatprep.subr.mxu0 0.0
        %287 = vmatpush1.xpose.msra.mxu0 0.0
        %288 = vmatprep.subr.mxu0 0.0
        %289 = vmatpush1.xpose.msra.mxu0 0.0
        %290 = vmatprep.subr.mxu0 0.0
        %291 = vmatpush1.xpose.msra.mxu0 0.0
        %292 = vmatprep.subr.mxu0 0.0
        %293 = vmatpush1.xpose.msra.mxu0 0.0
        %294 = vmatprep.subr.mxu0 0.0
        %295 = vmatpush1.xpose.msra.mxu0 0.0
        %296 = vmatprep.subr.mxu0 0.0
        %297 = vmatpush1.xpose.msra.mxu0 0.0
        %298 = vmatprep.subr.mxu0 0.0
        %299 = vmatpush1.xpose.msra.mxu0 0.0
        %300 = vmatprep.subr.mxu0 0.0
        %301 = vmatpush1.xpose.msra.mxu0 0.0
        %302 = vmatprep.subr.mxu0 0.0
        %303 = vmatpush1.xpose.msra.mxu0 0.0
        %304 = vmatprep.subr.mxu0 0.0
        %305 = vmatpush1.xpose.msra.mxu0 0.0
        %306 = vmatprep.subr.mxu0 0.0
        %307 = vmatpush1.xpose.msra.mxu0 0.0
        %308 = vmatprep.subr.mxu0 0.0
        %309 = vmatpush1.xpose.msra.mxu0 0.0
        %310 = vmatprep.mubr.f32.mxu0 0.0
        %v311 = vand.u32 %v229, 4294901760
        %v312 = vsub.f32 %v229, %v311
        %v313 = vand.u32 %v312, 4294901760
        %v314 = vsub.f32 %v312, %v313
        %v315 = vand.u32 %v314, 4294901760
        %316 = vmatmul.mubr.f32.gmra.mrb[0].mxu0 %v315
        %v317 = vpop.f32.mrb[0].mxu0
        %v318 = vadd.f32 0.0, %v317
        %v319 = vpop.f32.mrb[0].mxu0
        %320 = vmatprep.mubr.f32.mxu0 0.0
        %v321 = vand.u32 %v232, 4294901760
        %v322 = vsub.f32 %v232, %v321
        %v323 = vand.u32 %v322, 4294901760
        %v324 = vsub.f32 %v322, %v323
        %v325 = vand.u32 %v324, 4294901760
        %326 = vmatmul.mubr.f32.gmra.mrb[0].mxu0 %v325
        %v327 = vpop.f32.mrb[0].mxu0
        %v328 = vadd.f32 0.0, %v327
        %v329 = vpop.f32.mrb[0].mxu0
        %330 = vdwg.mxu0
        %331 = vmatprep.subr.mxu0 0.0
        %v332 = vand.u32 %v235, 4294901760
        %v333 = vsub.f32 %v235, %v332
        %v334 = vand.u32 %v333, 4294901760
        %v335 = vsub.f32 %v333, %v334
        %v336 = vand.u32 %v335, 4294901760
        %337 = vmatpush1.xpose.msra.mxu0 %v336
        %338 = vmatprep.subr.mxu0 0.0
        %v339 = vand.u32 %v238, 4294901760
        %v340 = vsub.f32 %v238, %v339
        %v341 = vand.u32 %v340, 4294901760
        %v342 = vsub.f32 %v340, %v341
        %v343 = vand.u32 %v342, 4294901760
        %344 = vmatpush1.xpose.msra.mxu0 %v343
        %345 = vmatprep.subr.mxu0 0.0
        %v346 = vand.u32 %v241, 4294901760
        %v347 = vsub.f32 %v241, %v346
        %v348 = vand.u32 %v347, 4294901760
        %v349 = vsub.f32 %v347, %v348
        %v350 = vand.u32 %v349, 4294901760
        %351 = vmatpush1.xpose.msra.mxu0 %v350
        %352 = vmatprep.subr.mxu0 0.0
        %353 = vmatpush1.xpose.msra.mxu0 0.0
        %354 = vmatprep.subr.mxu0 0.0
        %355 = vmatpush1.xpose.msra.mxu0 0.0
        %356 = vmatprep.subr.mxu0 0.0
        %357 = vmatpush1.xpose.msra.mxu0 0.0
        %358 = vmatprep.subr.mxu0 0.0
        %359 = vmatpush1.xpose.msra.mxu0 0.0
        %360 = vmatprep.subr.mxu0 0.0
        %361 = vmatpush1.xpose.msra.mxu0 0.0
        %362 = vmatprep.subr.mxu0 0.0
        %363 = vmatpush1.xpose.msra.mxu0 0.0
        %364 = vmatprep.subr.mxu0 0.0
        %365 = vmatpush1.xpose.msra.mxu0 0.0
        %366 = vmatprep.subr.mxu0 0.0
        %367 = vmatpush1.xpose.msra.mxu0 0.0
        %368 = vmatprep.subr.mxu0 0.0
        %369 = vmatpush1.xpose.msra.mxu0 0.0
        %370 = vmatprep.subr.mxu0 0.0
        %371 = vmatpush1.xpose.msra.mxu0 0.0
        %372 = vmatprep.subr.mxu0 0.0
        %373 = vmatpush1.xpose.msra.mxu0 0.0
        %374 = vmatprep.subr.mxu0 0.0
        %375 = vmatpush1.xpose.msra.mxu0 0.0
        %376 = vmatprep.subr.mxu0 0.0
        %377 = vmatpush1.xpose.msra.mxu0 0.0
        %378 = vmatprep.subr.mxu0 0.0
        %379 = vmatpush1.xpose.msra.mxu0 0.0
        %380 = vmatprep.subr.mxu0 0.0
        %381 = vmatpush1.xpose.msra.mxu0 0.0
        %382 = vmatprep.subr.mxu0 0.0
        %383 = vmatpush1.xpose.msra.mxu0 0.0
        %384 = vmatprep.subr.mxu0 0.0
        %385 = vmatpush1.xpose.msra.mxu0 0.0
        %386 = vmatprep.subr.mxu0 0.0
        %387 = vmatpush1.xpose.msra.mxu0 0.0
        %388 = vmatprep.subr.mxu0 0.0
        %389 = vmatpush1.xpose.msra.mxu0 0.0
        %390 = vmatprep.subr.mxu0 0.0
        %391 = vmatpush1.xpose.msra.mxu0 0.0
        %392 = vmatprep.subr.mxu0 0.0
        %393 = vmatpush1.xpose.msra.mxu0 0.0
        %394 = vmatprep.subr.mxu0 0.0
        %395 = vmatpush1.xpose.msra.mxu0 0.0
        %396 = vmatprep.subr.mxu0 0.0
        %397 = vmatpush1.xpose.msra.mxu0 0.0
        %398 = vmatprep.subr.mxu0 0.0
        %399 = vmatpush1.xpose.msra.mxu0 0.0
        %400 = vmatprep.subr.mxu0 0.0
        %401 = vmatpush1.xpose.msra.mxu0 0.0
        %402 = vmatprep.subr.mxu0 0.0
        %403 = vmatpush1.xpose.msra.mxu0 0.0
        %404 = vmatprep.subr.mxu0 0.0
        %405 = vmatpush1.xpose.msra.mxu0 0.0
        %406 = vmatprep.subr.mxu0 0.0
        %407 = vmatpush1.xpose.msra.mxu0 0.0
        %408 = vmatprep.subr.mxu0 0.0
        %409 = vmatpush1.xpose.msra.mxu0 0.0
        %410 = vmatprep.mubr.f32.mxu0 0.0
        %v411 = vand.u32 %v229, 4294901760
        %412 = vmatmul.mubr.f32.gmra.mrb[0].mxu0 %v411
        %v413 = vpop.f32.mrb[0].mxu0
        %v414 = vadd.f32 %v318, %v413
        %v415 = vpop.f32.mrb[0].mxu0
        %416 = vmatprep.mubr.f32.mxu0 0.0
        %v417 = vand.u32 %v232, 4294901760
        %418 = vmatmul.mubr.f32.gmra.mrb[0].mxu0 %v417
        %v419 = vpop.f32.mrb[0].mxu0
        %v420 = vadd.f32 %v328, %v419
        %v421 = vpop.f32.mrb[0].mxu0
        %422 = vdwg.mxu0
        %423 = vmatprep.subr.mxu0 0.0
        %v424 = vand.u32 %v235, 4294901760
        %v425 = vsub.f32 %v235, %v424
        %426 = vmatpush1.xpose.msra.mxu0 %v425
        %427 = vmatprep.subr.mxu0 0.0
        %v428 = vand.u32 %v238, 4294901760
        %v429 = vsub.f32 %v238, %v428
        %430 = vmatpush1.xpose.msra.mxu0 %v429
        %431 = vmatprep.subr.mxu0 0.0
        %v432 = vand.u32 %v241, 4294901760
        %v433 = vsub.f32 %v241, %v432
        %434 = vmatpush1.xpose.msra.mxu0 %v433
        %435 = vmatprep.subr.mxu0 0.0
        %436 = vmatpush1.xpose.msra.mxu0 0.0
        %437 = vmatprep.subr.mxu0 0.0
        %438 = vmatpush1.xpose.msra.mxu0 0.0
        %439 = vmatprep.subr.mxu0 0.0
        %440 = vmatpush1.xpose.msra.mxu0 0.0
        %441 = vmatprep.subr.mxu0 0.0
        %442 = vmatpush1.xpose.msra.mxu0 0.0
        %443 = vmatprep.subr.mxu0 0.0
        %444 = vmatpush1.xpose.msra.mxu0 0.0
        %445 = vmatprep.subr.mxu0 0.0
        %446 = vmatpush1.xpose.msra.mxu0 0.0
        %447 = vmatprep.subr.mxu0 0.0
        %448 = vmatpush1.xpose.msra.mxu0 0.0
        %449 = vmatprep.subr.mxu0 0.0
        %450 = vmatpush1.xpose.msra.mxu0 0.0
        %451 = vmatprep.subr.mxu0 0.0
        %452 = vmatpush1.xpose.msra.mxu0 0.0
        %453 = vmatprep.subr.mxu0 0.0
        %454 = vmatpush1.xpose.msra.mxu0 0.0
        %455 = vmatprep.subr.mxu0 0.0
        %456 = vmatpush1.xpose.msra.mxu0 0.0
        %457 = vmatprep.subr.mxu0 0.0
        %458 = vmatpush1.xpose.msra.mxu0 0.0
        %459 = vmatprep.subr.mxu0 0.0
        %460 = vmatpush1.xpose.msra.mxu0 0.0
        %461 = vmatprep.subr.mxu0 0.0
        %462 = vmatpush1.xpose.msra.mxu0 0.0
        %463 = vmatprep.subr.mxu0 0.0
        %464 = vmatpush1.xpose.msra.mxu0 0.0
        %465 = vmatprep.subr.mxu0 0.0
        %466 = vmatpush1.xpose.msra.mxu0 0.0
        %467 = vmatprep.subr.mxu0 0.0
        %468 = vmatpush1.xpose.msra.mxu0 0.0
        %469 = vmatprep.subr.mxu0 0.0
        %470 = vmatpush1.xpose.msra.mxu0 0.0
        %471 = vmatprep.subr.mxu0 0.0
        %472 = vmatpush1.xpose.msra.mxu0 0.0
        %473 = vmatprep.subr.mxu0 0.0
        %474 = vmatpush1.xpose.msra.mxu0 0.0
        %475 = vmatprep.subr.mxu0 0.0
        %476 = vmatpush1.xpose.msra.mxu0 0.0
        %477 = vmatprep.subr.mxu0 0.0
        %478 = vmatpush1.xpose.msra.mxu0 0.0
        %479 = vmatprep.subr.mxu0 0.0
        %480 = vmatpush1.xpose.msra.mxu0 0.0
        %481 = vmatprep.subr.mxu0 0.0
        %482 = vmatpush1.xpose.msra.mxu0 0.0
        %483 = vmatprep.subr.mxu0 0.0
        %484 = vmatpush1.xpose.msra.mxu0 0.0
        %485 = vmatprep.subr.mxu0 0.0
        %486 = vmatpush1.xpose.msra.mxu0 0.0
        %487 = vmatprep.subr.mxu0 0.0
        %488 = vmatpush1.xpose.msra.mxu0 0.0
        %489 = vmatprep.subr.mxu0 0.0
        %490 = vmatpush1.xpose.msra.mxu0 0.0
        %491 = vmatprep.subr.mxu0 0.0
        %492 = vmatpush1.xpose.msra.mxu0 0.0
        %493 = vmatprep.mubr.f32.mxu0 0.0
        %v494 = vand.u32 %v229, 4294901760
        %v495 = vsub.f32 %v229, %v494
        %496 = vmatmul.mubr.f32.gmra.mrb[0].mxu0 %v495
        %v497 = vpop.f32.mrb[0].mxu0
        %v498 = vadd.f32 %v414, %v497
        %v499 = vpop.f32.mrb[0].mxu0
        %500 = vmatprep.mubr.f32.mxu0 0.0
        %v501 = vand.u32 %v232, 4294901760
        %v502 = vsub.f32 %v232, %v501
        %503 = vmatmul.mubr.f32.gmra.mrb[0].mxu0 %v502
        %v504 = vpop.f32.mrb[0].mxu0
        %v505 = vadd.f32 %v420, %v504
        %v506 = vpop.f32.mrb[0].mxu0
        %507 = vdwg.mxu0
        %508 = vmatprep.subr.mxu0 0.0
        %v509 = vand.u32 %v235, 4294901760
        %510 = vmatpush1.xpose.msra.mxu0 %v509
        %511 = vmatprep.subr.mxu0 0.0
        %v512 = vand.u32 %v238, 4294901760
        %513 = vmatpush1.xpose.msra.mxu0 %v512
        %514 = vmatprep.subr.mxu0 0.0
        %v515 = vand.u32 %v241, 4294901760
        %516 = vmatpush1.xpose.msra.mxu0 %v515
        %517 = vmatprep.subr.mxu0 0.0
        %518 = vmatpush1.xpose.msra.mxu0 0.0
        %519 = vmatprep.subr.mxu0 0.0
        %520 = vmatpush1.xpose.msra.mxu0 0.0
        %521 = vmatprep.subr.mxu0 0.0
        %522 = vmatpush1.xpose.msra.mxu0 0.0
        %523 = vmatprep.subr.mxu0 0.0
        %524 = vmatpush1.xpose.msra.mxu0 0.0
        %525 = vmatprep.subr.mxu0 0.0
        %526 = vmatpush1.xpose.msra.mxu0 0.0
        %527 = vmatprep.subr.mxu0 0.0
        %528 = vmatpush1.xpose.msra.mxu0 0.0
        %529 = vmatprep.subr.mxu0 0.0
        %530 = vmatpush1.xpose.msra.mxu0 0.0
        %531 = vmatprep.subr.mxu0 0.0
        %532 = vmatpush1.xpose.msra.mxu0 0.0
        %533 = vmatprep.subr.mxu0 0.0
        %534 = vmatpush1.xpose.msra.mxu0 0.0
        %535 = vmatprep.subr.mxu0 0.0
        %536 = vmatpush1.xpose.msra.mxu0 0.0
        %537 = vmatprep.subr.mxu0 0.0
        %538 = vmatpush1.xpose.msra.mxu0 0.0
        %539 = vmatprep.subr.mxu0 0.0
        %540 = vmatpush1.xpose.msra.mxu0 0.0
        %541 = vmatprep.subr.mxu0 0.0
        %542 = vmatpush1.xpose.msra.mxu0 0.0
        %543 = vmatprep.subr.mxu0 0.0
        %544 = vmatpush1.xpose.msra.mxu0 0.0
        %545 = vmatprep.subr.mxu0 0.0
        %546 = vmatpush1.xpose.msra.mxu0 0.0
        %547 = vmatprep.subr.mxu0 0.0
        %548 = vmatpush1.xpose.msra.mxu0 0.0
        %549 = vmatprep.subr.mxu0 0.0
        %550 = vmatpush1.xpose.msra.mxu0 0.0
        %551 = vmatprep.subr.mxu0 0.0
        %552 = vmatpush1.xpose.msra.mxu0 0.0
        %553 = vmatprep.subr.mxu0 0.0
        %554 = vmatpush1.xpose.msra.mxu0 0.0
        %555 = vmatprep.subr.mxu0 0.0
        %556 = vmatpush1.xpose.msra.mxu0 0.0
        %557 = vmatprep.subr.mxu0 0.0
        %558 = vmatpush1.xpose.msra.mxu0 0.0
        %559 = vmatprep.subr.mxu0 0.0
        %560 = vmatpush1.xpose.msra.mxu0 0.0
        %561 = vmatprep.subr.mxu0 0.0
        %562 = vmatpush1.xpose.msra.mxu0 0.0
        %563 = vmatprep.subr.mxu0 0.0
        %564 = vmatpush1.xpose.msra.mxu0 0.0
        %565 = vmatprep.subr.mxu0 0.0
        %566 = vmatpush1.xpose.msra.mxu0 0.0
        %567 = vmatprep.subr.mxu0 0.0
        %568 = vmatpush1.xpose.msra.mxu0 0.0
        %569 = vmatprep.subr.mxu0 0.0
        %570 = vmatpush1.xpose.msra.mxu0 0.0
        %571 = vmatprep.subr.mxu0 0.0
        %572 = vmatpush1.xpose.msra.mxu0 0.0
        %573 = vmatprep.subr.mxu0 0.0
        %574 = vmatpush1.xpose.msra.mxu0 0.0
        %575 = vmatprep.mubr.f32.mxu0 0.0
        %v576 = vand.u32 %v229, 4294901760
        %v577 = vsub.f32 %v229, %v576
        %v578 = vand.u32 %v577, 4294901760
        %579 = vmatmul.mubr.f32.gmra.mrb[0].mxu0 %v578
        %v580 = vpop.f32.mrb[0].mxu0
        %v581 = vadd.f32 %v498, %v580
        %v582 = vpop.f32.mrb[0].mxu0
        %583 = vmatprep.mubr.f32.mxu0 0.0
        %v584 = vand.u32 %v232, 4294901760
        %v585 = vsub.f32 %v232, %v584
        %v586 = vand.u32 %v585, 4294901760
        %587 = vmatmul.mubr.f32.gmra.mrb[0].mxu0 %v586
        %v588 = vpop.f32.mrb[0].mxu0
        %v589 = vadd.f32 %v505, %v588
        %v590 = vpop.f32.mrb[0].mxu0
        %591 = vdwg.mxu0
        %592 = vmatprep.subr.mxu0 0.0
        %v593 = vand.u32 %v235, 4294901760
        %v594 = vsub.f32 %v235, %v593
        %v595 = vand.u32 %v594, 4294901760
        %596 = vmatpush1.xpose.msra.mxu0 %v595
        %597 = vmatprep.subr.mxu0 0.0
        %v598 = vand.u32 %v238, 4294901760
        %v599 = vsub.f32 %v238, %v598
        %v600 = vand.u32 %v599, 4294901760
        %601 = vmatpush1.xpose.msra.mxu0 %v600
        %602 = vmatprep.subr.mxu0 0.0
        %v603 = vand.u32 %v241, 4294901760
        %v604 = vsub.f32 %v241, %v603
        %v605 = vand.u32 %v604, 4294901760
        %606 = vmatpush1.xpose.msra.mxu0 %v605
        %607 = vmatprep.subr.mxu0 0.0
        %608 = vmatpush1.xpose.msra.mxu0 0.0
        %609 = vmatprep.subr.mxu0 0.0
        %610 = vmatpush1.xpose.msra.mxu0 0.0
        %611 = vmatprep.subr.mxu0 0.0
        %612 = vmatpush1.xpose.msra.mxu0 0.0
        %613 = vmatprep.subr.mxu0 0.0
        %614 = vmatpush1.xpose.msra.mxu0 0.0
        %615 = vmatprep.subr.mxu0 0.0
        %616 = vmatpush1.xpose.msra.mxu0 0.0
        %617 = vmatprep.subr.mxu0 0.0
        %618 = vmatpush1.xpose.msra.mxu0 0.0
        %619 = vmatprep.subr.mxu0 0.0
        %620 = vmatpush1.xpose.msra.mxu0 0.0
        %621 = vmatprep.subr.mxu0 0.0
        %622 = vmatpush1.xpose.msra.mxu0 0.0
        %623 = vmatprep.subr.mxu0 0.0
        %624 = vmatpush1.xpose.msra.mxu0 0.0
        %625 = vmatprep.subr.mxu0 0.0
        %626 = vmatpush1.xpose.msra.mxu0 0.0
        %627 = vmatprep.subr.mxu0 0.0
        %628 = vmatpush1.xpose.msra.mxu0 0.0
        %629 = vmatprep.subr.mxu0 0.0
        %630 = vmatpush1.xpose.msra.mxu0 0.0
        %631 = vmatprep.subr.mxu0 0.0
        %632 = vmatpush1.xpose.msra.mxu0 0.0
        %633 = vmatprep.subr.mxu0 0.0
        %634 = vmatpush1.xpose.msra.mxu0 0.0
        %635 = vmatprep.subr.mxu0 0.0
        %636 = vmatpush1.xpose.msra.mxu0 0.0
        %637 = vmatprep.subr.mxu0 0.0
        %638 = vmatpush1.xpose.msra.mxu0 0.0
        %639 = vmatprep.subr.mxu0 0.0
        %640 = vmatpush1.xpose.msra.mxu0 0.0
        %641 = vmatprep.subr.mxu0 0.0
        %642 = vmatpush1.xpose.msra.mxu0 0.0
        %643 = vmatprep.subr.mxu0 0.0
        %644 = vmatpush1.xpose.msra.mxu0 0.0
        %645 = vmatprep.subr.mxu0 0.0
        %646 = vmatpush1.xpose.msra.mxu0 0.0
        %647 = vmatprep.subr.mxu0 0.0
        %648 = vmatpush1.xpose.msra.mxu0 0.0
        %649 = vmatprep.subr.mxu0 0.0
        %650 = vmatpush1.xpose.msra.mxu0 0.0
        %651 = vmatprep.subr.mxu0 0.0
        %652 = vmatpush1.xpose.msra.mxu0 0.0
        %653 = vmatprep.subr.mxu0 0.0
        %654 = vmatpush1.xpose.msra.mxu0 0.0
        %655 = vmatprep.subr.mxu0 0.0
        %656 = vmatpush1.xpose.msra.mxu0 0.0
        %657 = vmatprep.subr.mxu0 0.0
        %658 = vmatpush1.xpose.msra.mxu0 0.0
        %659 = vmatprep.subr.mxu0 0.0
        %660 = vmatpush1.xpose.msra.mxu0 0.0
        %661 = vmatprep.subr.mxu0 0.0
        %662 = vmatpush1.xpose.msra.mxu0 0.0
        %663 = vmatprep.subr.mxu0 0.0
        %664 = vmatpush1.xpose.msra.mxu0 0.0
        %665 = vmatprep.mubr.f32.mxu0 0.0
        %v666 = vand.u32 %v229, 4294901760
        %667 = vmatmul.mubr.f32.gmra.mrb[0].mxu0 %v666
        %v668 = vpop.f32.mrb[0].mxu0
        %v669 = vadd.f32 %v581, %v668
        %v670 = vpop.f32.mrb[0].mxu0
        %671 = vmatprep.mubr.f32.mxu0 0.0
        %v672 = vand.u32 %v232, 4294901760
        %673 = vmatmul.mubr.f32.gmra.mrb[0].mxu0 %v672
        %v674 = vpop.f32.mrb[0].mxu0
        %v675 = vadd.f32 %v589, %v674
        %v676 = vpop.f32.mrb[0].mxu0
        %677 = vdwg.mxu0
        %678 = vmatprep.subr.mxu0 0.0
        %v679 = vand.u32 %v235, 4294901760
        %680 = vmatpush1.xpose.msra.mxu0 %v679
        %681 = vmatprep.subr.mxu0 0.0
        %v682 = vand.u32 %v238, 4294901760
        %683 = vmatpush1.xpose.msra.mxu0 %v682
        %684 = vmatprep.subr.mxu0 0.0
        %v685 = vand.u32 %v241, 4294901760
        %686 = vmatpush1.xpose.msra.mxu0 %v685
        %687 = vmatprep.subr.mxu0 0.0
        %688 = vmatpush1.xpose.msra.mxu0 0.0
        %689 = vmatprep.subr.mxu0 0.0
        %690 = vmatpush1.xpose.msra.mxu0 0.0
        %691 = vmatprep.subr.mxu0 0.0
        %692 = vmatpush1.xpose.msra.mxu0 0.0
        %693 = vmatprep.subr.mxu0 0.0
        %694 = vmatpush1.xpose.msra.mxu0 0.0
        %695 = vmatprep.subr.mxu0 0.0
        %696 = vmatpush1.xpose.msra.mxu0 0.0
        %697 = vmatprep.subr.mxu0 0.0
        %698 = vmatpush1.xpose.msra.mxu0 0.0
        %699 = vmatprep.subr.mxu0 0.0
        %700 = vmatpush1.xpose.msra.mxu0 0.0
        %701 = vmatprep.subr.mxu0 0.0
        %702 = vmatpush1.xpose.msra.mxu0 0.0
        %703 = vmatprep.subr.mxu0 0.0
        %704 = vmatpush1.xpose.msra.mxu0 0.0
        %705 = vmatprep.subr.mxu0 0.0
        %706 = vmatpush1.xpose.msra.mxu0 0.0
        %707 = vmatprep.subr.mxu0 0.0
        %708 = vmatpush1.xpose.msra.mxu0 0.0
        %709 = vmatprep.subr.mxu0 0.0
        %710 = vmatpush1.xpose.msra.mxu0 0.0
        %711 = vmatprep.subr.mxu0 0.0
        %712 = vmatpush1.xpose.msra.mxu0 0.0
        %713 = vmatprep.subr.mxu0 0.0
        %714 = vmatpush1.xpose.msra.mxu0 0.0
        %715 = vmatprep.subr.mxu0 0.0
        %716 = vmatpush1.xpose.msra.mxu0 0.0
        %717 = vmatprep.subr.mxu0 0.0
        %718 = vmatpush1.xpose.msra.mxu0 0.0
        %719 = vmatprep.subr.mxu0 0.0
        %720 = vmatpush1.xpose.msra.mxu0 0.0
        %721 = vmatprep.subr.mxu0 0.0
        %722 = vmatpush1.xpose.msra.mxu0 0.0
        %723 = vmatprep.subr.mxu0 0.0
        %724 = vmatpush1.xpose.msra.mxu0 0.0
        %725 = vmatprep.subr.mxu0 0.0
        %726 = vmatpush1.xpose.msra.mxu0 0.0
        %727 = vmatprep.subr.mxu0 0.0
        %728 = vmatpush1.xpose.msra.mxu0 0.0
        %729 = vmatprep.subr.mxu0 0.0
        %730 = vmatpush1.xpose.msra.mxu0 0.0
        %731 = vmatprep.subr.mxu0 0.0
        %732 = vmatpush1.xpose.msra.mxu0 0.0
        %733 = vmatprep.subr.mxu0 0.0
        %734 = vmatpush1.xpose.msra.mxu0 0.0
        %735 = vmatprep.subr.mxu0 0.0
        %736 = vmatpush1.xpose.msra.mxu0 0.0
        %737 = vmatprep.subr.mxu0 0.0
        %738 = vmatpush1.xpose.msra.mxu0 0.0
        %739 = vmatprep.subr.mxu0 0.0
        %740 = vmatpush1.xpose.msra.mxu0 0.0
        %741 = vmatprep.subr.mxu0 0.0
        %742 = vmatpush1.xpose.msra.mxu0 0.0
        %743 = vmatprep.subr.mxu0 0.0
        %744 = vmatpush1.xpose.msra.mxu0 0.0
        %745 = vmatprep.mubr.f32.mxu0 0.0
        %v746 = vand.u32 %v229, 4294901760
        %747 = vmatmul.mubr.f32.gmra.mrb[0].mxu0 %v746
        %v748 = vpop.f32.mrb[0].mxu0
        %v749 = vadd.f32 %v669, %v748
        %v750 = vpop.f32.mrb[0].mxu0
        %751 = vmatprep.mubr.f32.mxu0 0.0
        %v752 = vand.u32 %v232, 4294901760
        %753 = vmatmul.mubr.f32.gmra.mrb[0].mxu0 %v752
        %v754 = vpop.f32.mrb[0].mxu0
        %v755 = vadd.f32 %v675, %v754
        %v756 = vpop.f32.mrb[0].mxu0
        %757 = vdwg.mxu0
        %vm758 = vcmask 195584
        %v759 = vsel %vm758, %v749, -inf
        %760 = vmax.xlane.f32.xlu0 %v759
        %v761 = vpop.xlane.xlu0 %760
        %v762 = vsel %vm758, %v755, -inf
        %763 = vmax.xlane.f32.xlu0 %v762
        %v764 = vpop.xlane.xlu0 %763
        %v765 = vsub.f32 %v749, %v761
        %v766 = vsub.f32 %v755, %v764
        %v767 = vmul.f32 %v765, 1.442695
        %v768 = vpow.pop %v767
        %v769 = vmul.f32 %v766, 1.442695
        %v770 = vpow.pop %v769
        %v771 = vsel %vm758, %v768, 0.0
        %772 = vadd.xlane.f32.xlu0 %v771
        %v773 = vpop.xlane.xlu0 %772
        %v774 = vsel %vm758, %v770, 0.0
        %775 = vadd.xlane.f32.xlu0 %v774
        %v776 = vpop.xlane.xlu0 %775
        %v777 = vrcp.pop %v773
        %v778 = vmul.f32 %v768, %v777
        %v779 = vrcp.pop %v776
        %v780 = vmul.f32 %v770, %v779
        %v782 = vsel %vm758, %v778, 0
        %v785 = vsel %vm758, %v780, 0
        %787 = vmatprep.subr.mxu0 0.0
        %v788 = vand.u32 %v224, 4294901760
        %789 = vmatpush1.msra.mxu0 %v788
        %790 = vmatprep.subr.mxu0 0.0
        %v791 = vand.u32 %v225, 4294901760
        %792 = vmatpush1.msra.mxu0 %v791
        %793 = vmatprep.subr.mxu0 0.0
        %v794 = vand.u32 %v226, 4294901760
        %795 = vmatpush1.msra.mxu0 %v794
        %796 = vmatprep.subr.mxu0 0.0
        %797 = vmatpush1.msra.mxu0 0.0
        %798 = vmatprep.subr.mxu0 0.0
        %799 = vmatpush1.msra.mxu0 0.0
        %800 = vmatprep.subr.mxu0 0.0
        %801 = vmatpush1.msra.mxu0 0.0
        %802 = vmatprep.subr.mxu0 0.0
        %803 = vmatpush1.msra.mxu0 0.0
        %804 = vmatprep.subr.mxu0 0.0
        %805 = vmatpush1.msra.mxu0 0.0
        %806 = vmatprep.subr.mxu0 0.0
        %807 = vmatpush1.msra.mxu0 0.0
        %808 = vmatprep.subr.mxu0 0.0
        %809 = vmatpush1.msra.mxu0 0.0
        %810 = vmatprep.subr.mxu0 0.0
        %811 = vmatpush1.msra.mxu0 0.0
        %812 = vmatprep.subr.mxu0 0.0
        %813 = vmatpush1.msra.mxu0 0.0
        %814 = vmatprep.subr.mxu0 0.0
        %815 = vmatpush1.msra.mxu0 0.0
        %816 = vmatprep.subr.mxu0 0.0
        %817 = vmatpush1.msra.mxu0 0.0
        %818 = vmatprep.subr.mxu0 0.0
        %819 = vmatpush1.msra.mxu0 0.0
        %820 = vmatprep.subr.mxu0 0.0
        %821 = vmatpush1.msra.mxu0 0.0
        %822 = vmatprep.subr.mxu0 0.0
        %823 = vmatpush1.msra.mxu0 0.0
        %824 = vmatprep.subr.mxu0 0.0
        %825 = vmatpush1.msra.mxu0 0.0
        %826 = vmatprep.subr.mxu0 0.0
        %827 = vmatpush1.msra.mxu0 0.0
        %828 = vmatprep.subr.mxu0 0.0
        %829 = vmatpush1.msra.mxu0 0.0
        %830 = vmatprep.subr.mxu0 0.0
        %831 = vmatpush1.msra.mxu0 0.0
        %832 = vmatprep.subr.mxu0 0.0
        %833 = vmatpush1.msra.mxu0 0.0
        %834 = vmatprep.subr.mxu0 0.0
        %835 = vmatpush1.msra.mxu0 0.0
        %836 = vmatprep.subr.mxu0 0.0
        %837 = vmatpush1.msra.mxu0 0.0
        %838 = vmatprep.subr.mxu0 0.0
        %839 = vmatpush1.msra.mxu0 0.0
        %840 = vmatprep.subr.mxu0 0.0
        %841 = vmatpush1.msra.mxu0 0.0
        %842 = vmatprep.subr.mxu0 0.0
        %843 = vmatpush1.msra.mxu0 0.0
        %844 = vmatprep.subr.mxu0 0.0
        %845 = vmatpush1.msra.mxu0 0.0
        %846 = vmatprep.subr.mxu0 0.0
        %847 = vmatpush1.msra.mxu0 0.0
        %848 = vmatprep.subr.mxu0 0.0
        %849 = vmatpush1.msra.mxu0 0.0
        %850 = vmatprep.subr.mxu0 0.0
        %851 = vmatpush1.msra.mxu0 0.0
        %852 = vmatprep.subr.mxu0 0.0
        %853 = vmatpush1.msra.mxu0 0.0
        %854 = vmatprep.mubr.f32.mxu0 0.0
        %v855 = vand.u32 %v782, 4294901760
        %v856 = vsub.f32 %v782, %v855
        %v857 = vand.u32 %v856, 4294901760
        %v858 = vsub.f32 %v856, %v857
        %v859 = vand.u32 %v858, 4294901760
        %860 = vmatmul.mubr.f32.gmra.mrb[0].mxu0 %v859
        %v861 = vpop.f32.mrb[0].mxu0
        %v862 = vadd.f32 0.0, %v861
        %v863 = vpop.f32.mrb[0].mxu0
        %864 = vmatprep.mubr.f32.mxu0 0.0
        %v865 = vand.u32 %v785, 4294901760
        %v866 = vsub.f32 %v785, %v865
        %v867 = vand.u32 %v866, 4294901760
        %v868 = vsub.f32 %v866, %v867
        %v869 = vand.u32 %v868, 4294901760
        %870 = vmatmul.mubr.f32.gmra.mrb[0].mxu0 %v869
        %v871 = vpop.f32.mrb[0].mxu0
        %v872 = vadd.f32 0.0, %v871
        %v873 = vpop.f32.mrb[0].mxu0
        %874 = vdwg.mxu0
        %875 = vmatprep.subr.mxu0 0.0
        %v876 = vand.u32 %v224, 4294901760
        %v877 = vsub.f32 %v224, %v876
        %v878 = vand.u32 %v877, 4294901760
        %v879 = vsub.f32 %v877, %v878
        %v880 = vand.u32 %v879, 4294901760
        %881 = vmatpush1.msra.mxu0 %v880
        %882 = vmatprep.subr.mxu0 0.0
        %v883 = vand.u32 %v225, 4294901760
        %v884 = vsub.f32 %v225, %v883
        %v885 = vand.u32 %v884, 4294901760
        %v886 = vsub.f32 %v884, %v885
        %v887 = vand.u32 %v886, 4294901760
        %888 = vmatpush1.msra.mxu0 %v887
        %889 = vmatprep.subr.mxu0 0.0
        %v890 = vand.u32 %v226, 4294901760
        %v891 = vsub.f32 %v226, %v890
        %v892 = vand.u32 %v891, 4294901760
        %v893 = vsub.f32 %v891, %v892
        %v894 = vand.u32 %v893, 4294901760
        %895 = vmatpush1.msra.mxu0 %v894
        %896 = vmatprep.subr.mxu0 0.0
        %897 = vmatpush1.msra.mxu0 0.0
        %898 = vmatprep.subr.mxu0 0.0
        %899 = vmatpush1.msra.mxu0 0.0
        %900 = vmatprep.subr.mxu0 0.0
        %901 = vmatpush1.msra.mxu0 0.0
        %902 = vmatprep.subr.mxu0 0.0
        %903 = vmatpush1.msra.mxu0 0.0
        %904 = vmatprep.subr.mxu0 0.0
        %905 = vmatpush1.msra.mxu0 0.0
        %906 = vmatprep.subr.mxu0 0.0
        %907 = vmatpush1.msra.mxu0 0.0
        %908 = vmatprep.subr.mxu0 0.0
        %909 = vmatpush1.msra.mxu0 0.0
        %910 = vmatprep.subr.mxu0 0.0
        %911 = vmatpush1.msra.mxu0 0.0
        %912 = vmatprep.subr.mxu0 0.0
        %913 = vmatpush1.msra.mxu0 0.0
        %914 = vmatprep.subr.mxu0 0.0
        %915 = vmatpush1.msra.mxu0 0.0
        %916 = vmatprep.subr.mxu0 0.0
        %917 = vmatpush1.msra.mxu0 0.0
        %918 = vmatprep.subr.mxu0 0.0
        %919 = vmatpush1.msra.mxu0 0.0
        %920 = vmatprep.subr.mxu0 0.0
        %921 = vmatpush1.msra.mxu0 0.0
        %922 = vmatprep.subr.mxu0 0.0
        %923 = vmatpush1.msra.mxu0 0.0
        %924 = vmatprep.subr.mxu0 0.0
        %925 = vmatpush1.msra.mxu0 0.0
        %926 = vmatprep.subr.mxu0 0.0
        %927 = vmatpush1.msra.mxu0 0.0
        %928 = vmatprep.subr.mxu0 0.0
        %929 = vmatpush1.msra.mxu0 0.0
        %930 = vmatprep.subr.mxu0 0.0
        %931 = vmatpush1.msra.mxu0 0.0
        %932 = vmatprep.subr.mxu0 0.0
        %933 = vmatpush1.msra.mxu0 0.0
        %934 = vmatprep.subr.mxu0 0.0
        %935 = vmatpush1.msra.mxu0 0.0
        %936 = vmatprep.subr.mxu0 0.0
        %937 = vmatpush1.msra.mxu0 0.0
        %938 = vmatprep.subr.mxu0 0.0
        %939 = vmatpush1.msra.mxu0 0.0
        %940 = vmatprep.subr.mxu0 0.0
        %941 = vmatpush1.msra.mxu0 0.0
        %942 = vmatprep.subr.mxu0 0.0
        %943 = vmatpush1.msra.mxu0 0.0
        %944 = vmatprep.subr.mxu0 0.0
        %945 = vmatpush1.msra.mxu0 0.0
        %946 = vmatprep.subr.mxu0 0.0
        %947 = vmatpush1.msra.mxu0 0.0
        %948 = vmatprep.subr.mxu0 0.0
        %949 = vmatpush1.msra.mxu0 0.0
        %950 = vmatprep.subr.mxu0 0.0
        %951 = vmatpush1.msra.mxu0 0.0
        %952 = vmatprep.subr.mxu0 0.0
        %953 = vmatpush1.msra.mxu0 0.0
        %954 = vmatprep.mubr.f32.mxu0 0.0
        %v955 = vand.u32 %v782, 4294901760
        %956 = vmatmul.mubr.f32.gmra.mrb[0].mxu0 %v955
        %v957 = vpop.f32.mrb[0].mxu0
        %v958 = vadd.f32 %v862, %v957
        %v959 = vpop.f32.mrb[0].mxu0
        %960 = vmatprep.mubr.f32.mxu0 0.0
        %v961 = vand.u32 %v785, 4294901760
        %962 = vmatmul.mubr.f32.gmra.mrb[0].mxu0 %v961
        %v963 = vpop.f32.mrb[0].mxu0
        %v964 = vadd.f32 %v872, %v963
        %v965 = vpop.f32.mrb[0].mxu0
        %966 = vdwg.mxu0
        %967 = vmatprep.subr.mxu0 0.0
        %v968 = vand.u32 %v224, 4294901760
        %v969 = vsub.f32 %v224, %v968
        %970 = vmatpush1.msra.mxu0 %v969
        %971 = vmatprep.subr.mxu0 0.0
        %v972 = vand.u32 %v225, 4294901760
        %v973 = vsub.f32 %v225, %v972
        %974 = vmatpush1.msra.mxu0 %v973
        %975 = vmatprep.subr.mxu0 0.0
        %v976 = vand.u32 %v226, 4294901760
        %v977 = vsub.f32 %v226, %v976
        %978 = vmatpush1.msra.mxu0 %v977
        %979 = vmatprep.subr.mxu0 0.0
        %980 = vmatpush1.msra.mxu0 0.0
        %981 = vmatprep.subr.mxu0 0.0
        %982 = vmatpush1.msra.mxu0 0.0
        %983 = vmatprep.subr.mxu0 0.0
        %984 = vmatpush1.msra.mxu0 0.0
        %985 = vmatprep.subr.mxu0 0.0
        %986 = vmatpush1.msra.mxu0 0.0
        %987 = vmatprep.subr.mxu0 0.0
        %988 = vmatpush1.msra.mxu0 0.0
        %989 = vmatprep.subr.mxu0 0.0
        %990 = vmatpush1.msra.mxu0 0.0
        %991 = vmatprep.subr.mxu0 0.0
        %992 = vmatpush1.msra.mxu0 0.0
        %993 = vmatprep.subr.mxu0 0.0
        %994 = vmatpush1.msra.mxu0 0.0
        %995 = vmatprep.subr.mxu0 0.0
        %996 = vmatpush1.msra.mxu0 0.0
        %997 = vmatprep.subr.mxu0 0.0
        %998 = vmatpush1.msra.mxu0 0.0
        %999 = vmatprep.subr.mxu0 0.0
        %1000 = vmatpush1.msra.mxu0 0.0
        %1001 = vmatprep.subr.mxu0 0.0
        %1002 = vmatpush1.msra.mxu0 0.0
        %1003 = vmatprep.subr.mxu0 0.0
        %1004 = vmatpush1.msra.mxu0 0.0
        %1005 = vmatprep.subr.mxu0 0.0
        %1006 = vmatpush1.msra.mxu0 0.0
        %1007 = vmatprep.subr.mxu0 0.0
        %1008 = vmatpush1.msra.mxu0 0.0
        %1009 = vmatprep.subr.mxu0 0.0
        %1010 = vmatpush1.msra.mxu0 0.0
        %1011 = vmatprep.subr.mxu0 0.0
        %1012 = vmatpush1.msra.mxu0 0.0
        %1013 = vmatprep.subr.mxu0 0.0
        %1014 = vmatpush1.msra.mxu0 0.0
        %1015 = vmatprep.subr.mxu0 0.0
        %1016 = vmatpush1.msra.mxu0 0.0
        %1017 = vmatprep.subr.mxu0 0.0
        %1018 = vmatpush1.msra.mxu0 0.0
        %1019 = vmatprep.subr.mxu0 0.0
        %1020 = vmatpush1.msra.mxu0 0.0
        %1021 = vmatprep.subr.mxu0 0.0
        %1022 = vmatpush1.msra.mxu0 0.0
        %1023 = vmatprep.subr.mxu0 0.0
        %1024 = vmatpush1.msra.mxu0 0.0
        %1025 = vmatprep.subr.mxu0 0.0
        %1026 = vmatpush1.msra.mxu0 0.0
        %1027 = vmatprep.subr.mxu0 0.0
        %1028 = vmatpush1.msra.mxu0 0.0
        %1029 = vmatprep.subr.mxu0 0.0
        %1030 = vmatpush1.msra.mxu0 0.0
        %1031 = vmatprep.subr.mxu0 0.0
        %1032 = vmatpush1.msra.mxu0 0.0
        %1033 = vmatprep.subr.mxu0 0.0
        %1034 = vmatpush1.msra.mxu0 0.0
        %1035 = vmatprep.subr.mxu0 0.0
        %1036 = vmatpush1.msra.mxu0 0.0
        %1037 = vmatprep.mubr.f32.mxu0 0.0
        %v1038 = vand.u32 %v782, 4294901760
        %v1039 = vsub.f32 %v782, %v1038
        %1040 = vmatmul.mubr.f32.gmra.mrb[0].mxu0 %v1039
        %v1041 = vpop.f32.mrb[0].mxu0
        %v1042 = vadd.f32 %v958, %v1041
        %v1043 = vpop.f32.mrb[0].mxu0
        %1044 = vmatprep.mubr.f32.mxu0 0.0
        %v1045 = vand.u32 %v785, 4294901760
        %v1046 = vsub.f32 %v785, %v1045
        %1047 = vmatmul.mubr.f32.gmra.mrb[0].mxu0 %v1046
        %v1048 = vpop.f32.mrb[0].mxu0
        %v1049 = vadd.f32 %v964, %v1048
        %v1050 = vpop.f32.mrb[0].mxu0
        %1051 = vdwg.mxu0
        %1052 = vmatprep.subr.mxu0 0.0
        %v1053 = vand.u32 %v224, 4294901760
        %1054 = vmatpush1.msra.mxu0 %v1053
        %1055 = vmatprep.subr.mxu0 0.0
        %v1056 = vand.u32 %v225, 4294901760
        %1057 = vmatpush1.msra.mxu0 %v1056
        %1058 = vmatprep.subr.mxu0 0.0
        %v1059 = vand.u32 %v226, 4294901760
        %1060 = vmatpush1.msra.mxu0 %v1059
        %1061 = vmatprep.subr.mxu0 0.0
        %1062 = vmatpush1.msra.mxu0 0.0
        %1063 = vmatprep.subr.mxu0 0.0
        %1064 = vmatpush1.msra.mxu0 0.0
        %1065 = vmatprep.subr.mxu0 0.0
        %1066 = vmatpush1.msra.mxu0 0.0
        %1067 = vmatprep.subr.mxu0 0.0
        %1068 = vmatpush1.msra.mxu0 0.0
        %1069 = vmatprep.subr.mxu0 0.0
        %1070 = vmatpush1.msra.mxu0 0.0
        %1071 = vmatprep.subr.mxu0 0.0
        %1072 = vmatpush1.msra.mxu0 0.0
        %1073 = vmatprep.subr.mxu0 0.0
        %1074 = vmatpush1.msra.mxu0 0.0
        %1075 = vmatprep.subr.mxu0 0.0
        %1076 = vmatpush1.msra.mxu0 0.0
        %1077 = vmatprep.subr.mxu0 0.0
        %1078 = vmatpush1.msra.mxu0 0.0
        %1079 = vmatprep.subr.mxu0 0.0
        %1080 = vmatpush1.msra.mxu0 0.0
        %1081 = vmatprep.subr.mxu0 0.0
        %1082 = vmatpush1.msra.mxu0 0.0
        %1083 = vmatprep.subr.mxu0 0.0
        %1084 = vmatpush1.msra.mxu0 0.0
        %1085 = vmatprep.subr.mxu0 0.0
        %1086 = vmatpush1.msra.mxu0 0.0
        %1087 = vmatprep.subr.mxu0 0.0
        %1088 = vmatpush1.msra.mxu0 0.0
        %1089 = vmatprep.subr.mxu0 0.0
        %1090 = vmatpush1.msra.mxu0 0.0
        %1091 = vmatprep.subr.mxu0 0.0
        %1092 = vmatpush1.msra.mxu0 0.0
        %1093 = vmatprep.subr.mxu0 0.0
        %1094 = vmatpush1.msra.mxu0 0.0
        %1095 = vmatprep.subr.mxu0 0.0
        %1096 = vmatpush1.msra.mxu0 0.0
        %1097 = vmatprep.subr.mxu0 0.0
        %1098 = vmatpush1.msra.mxu0 0.0
        %1099 = vmatprep.subr.mxu0 0.0
        %1100 = vmatpush1.msra.mxu0 0.0
        %1101 = vmatprep.subr.mxu0 0.0
        %1102 = vmatpush1.msra.mxu0 0.0
        %1103 = vmatprep.subr.mxu0 0.0
        %1104 = vmatpush1.msra.mxu0 0.0
        %1105 = vmatprep.subr.mxu0 0.0
        %1106 = vmatpush1.msra.mxu0 0.0
        %1107 = vmatprep.subr.mxu0 0.0
        %1108 = vmatpush1.msra.mxu0 0.0
        %1109 = vmatprep.subr.mxu0 0.0
        %1110 = vmatpush1.msra.mxu0 0.0
        %1111 = vmatprep.subr.mxu0 0.0
        %1112 = vmatpush1.msra.mxu0 0.0
        %1113 = vmatprep.subr.mxu0 0.0
        %1114 = vmatpush1.msra.mxu0 0.0
        %1115 = vmatprep.subr.mxu0 0.0
        %1116 = vmatpush1.msra.mxu0 0.0
        %1117 = vmatprep.subr.mxu0 0.0
        %1118 = vmatpush1.msra.mxu0 0.0
        %1119 = vmatprep.mubr.f32.mxu0 0.0
        %v1120 = vand.u32 %v782, 4294901760
        %v1121 = vsub.f32 %v782, %v1120
        %v1122 = vand.u32 %v1121, 4294901760
        %1123 = vmatmul.mubr.f32.gmra.mrb[0].mxu0 %v1122
        %v1124 = vpop.f32.mrb[0].mxu0
        %v1125 = vadd.f32 %v1042, %v1124
        %v1126 = vpop.f32.mrb[0].mxu0
        %1127 = vmatprep.mubr.f32.mxu0 0.0
        %v1128 = vand.u32 %v785, 4294901760
        %v1129 = vsub.f32 %v785, %v1128
        %v1130 = vand.u32 %v1129, 4294901760
        %1131 = vmatmul.mubr.f32.gmra.mrb[0].mxu0 %v1130
        %v1132 = vpop.f32.mrb[0].mxu0
        %v1133 = vadd.f32 %v1049, %v1132
        %v1134 = vpop.f32.mrb[0].mxu0
        %1135 = vdwg.mxu0
        %1136 = vmatprep.subr.mxu0 0.0
        %v1137 = vand.u32 %v224, 4294901760
        %v1138 = vsub.f32 %v224, %v1137
        %v1139 = vand.u32 %v1138, 4294901760
        %1140 = vmatpush1.msra.mxu0 %v1139
        %1141 = vmatprep.subr.mxu0 0.0
        %v1142 = vand.u32 %v225, 4294901760
        %v1143 = vsub.f32 %v225, %v1142
        %v1144 = vand.u32 %v1143, 4294901760
        %1145 = vmatpush1.msra.mxu0 %v1144
        %1146 = vmatprep.subr.mxu0 0.0
        %v1147 = vand.u32 %v226, 4294901760
        %v1148 = vsub.f32 %v226, %v1147
        %v1149 = vand.u32 %v1148, 4294901760
        %1150 = vmatpush1.msra.mxu0 %v1149
        %1151 = vmatprep.subr.mxu0 0.0
        %1152 = vmatpush1.msra.mxu0 0.0
        %1153 = vmatprep.subr.mxu0 0.0
        %1154 = vmatpush1.msra.mxu0 0.0
        %1155 = vmatprep.subr.mxu0 0.0
        %1156 = vmatpush1.msra.mxu0 0.0
        %1157 = vmatprep.subr.mxu0 0.0
        %1158 = vmatpush1.msra.mxu0 0.0
        %1159 = vmatprep.subr.mxu0 0.0
        %1160 = vmatpush1.msra.mxu0 0.0
        %1161 = vmatprep.subr.mxu0 0.0
        %1162 = vmatpush1.msra.mxu0 0.0
        %1163 = vmatprep.subr.mxu0 0.0
        %1164 = vmatpush1.msra.mxu0 0.0
        %1165 = vmatprep.subr.mxu0 0.0
        %1166 = vmatpush1.msra.mxu0 0.0
        %1167 = vmatprep.subr.mxu0 0.0
        %1168 = vmatpush1.msra.mxu0 0.0
        %1169 = vmatprep.subr.mxu0 0.0
        %1170 = vmatpush1.msra.mxu0 0.0
        %1171 = vmatprep.subr.mxu0 0.0
        %1172 = vmatpush1.msra.mxu0 0.0
        %1173 = vmatprep.subr.mxu0 0.0
        %1174 = vmatpush1.msra.mxu0 0.0
        %1175 = vmatprep.subr.mxu0 0.0
        %1176 = vmatpush1.msra.mxu0 0.0
        %1177 = vmatprep.subr.mxu0 0.0
        %1178 = vmatpush1.msra.mxu0 0.0
        %1179 = vmatprep.subr.mxu0 0.0
        %1180 = vmatpush1.msra.mxu0 0.0
        %1181 = vmatprep.subr.mxu0 0.0
        %1182 = vmatpush1.msra.mxu0 0.0
        %1183 = vmatprep.subr.mxu0 0.0
        %1184 = vmatpush1.msra.mxu0 0.0
        %1185 = vmatprep.subr.mxu0 0.0
        %1186 = vmatpush1.msra.mxu0 0.0
        %1187 = vmatprep.subr.mxu0 0.0
        %1188 = vmatpush1.msra.mxu0 0.0
        %1189 = vmatprep.subr.mxu0 0.0
        %1190 = vmatpush1.msra.mxu0 0.0
        %1191 = vmatprep.subr.mxu0 0.0
        %1192 = vmatpush1.msra.mxu0 0.0
        %1193 = vmatprep.subr.mxu0 0.0
        %1194 = vmatpush1.msra.mxu0 0.0
        %1195 = vmatprep.subr.mxu0 0.0
        %1196 = vmatpush1.msra.mxu0 0.0
        %1197 = vmatprep.subr.mxu0 0.0
        %1198 = vmatpush1.msra.mxu0 0.0
        %1199 = vmatprep.subr.mxu0 0.0
        %1200 = vmatpush1.msra.mxu0 0.0
        %1201 = vmatprep.subr.mxu0 0.0
        %1202 = vmatpush1.msra.mxu0 0.0
        %1203 = vmatprep.subr.mxu0 0.0
        %1204 = vmatpush1.msra.mxu0 0.0
        %1205 = vmatprep.subr.mxu0 0.0
        %1206 = vmatpush1.msra.mxu0 0.0
        %1207 = vmatprep.subr.mxu0 0.0
        %1208 = vmatpush1.msra.mxu0 0.0
        %1209 = vmatprep.mubr.f32.mxu0 0.0
        %v1210 = vand.u32 %v782, 4294901760
        %1211 = vmatmul.mubr.f32.gmra.mrb[0].mxu0 %v1210
        %v1212 = vpop.f32.mrb[0].mxu0
        %v1213 = vadd.f32 %v1125, %v1212
        %v1214 = vpop.f32.mrb[0].mxu0
        %1215 = vmatprep.mubr.f32.mxu0 0.0
        %v1216 = vand.u32 %v785, 4294901760
        %1217 = vmatmul.mubr.f32.gmra.mrb[0].mxu0 %v1216
        %v1218 = vpop.f32.mrb[0].mxu0
        %v1219 = vadd.f32 %v1133, %v1218
        %v1220 = vpop.f32.mrb[0].mxu0
        %1221 = vdwg.mxu0
        %1222 = vmatprep.subr.mxu0 0.0
        %v1223 = vand.u32 %v224, 4294901760
        %1224 = vmatpush1.msra.mxu0 %v1223
        %1225 = vmatprep.subr.mxu0 0.0
        %v1226 = vand.u32 %v225, 4294901760
        %1227 = vmatpush1.msra.mxu0 %v1226
        %1228 = vmatprep.subr.mxu0 0.0
        %v1229 = vand.u32 %v226, 4294901760
        %1230 = vmatpush1.msra.mxu0 %v1229
        %1231 = vmatprep.subr.mxu0 0.0
        %1232 = vmatpush1.msra.mxu0 0.0
        %1233 = vmatprep.subr.mxu0 0.0
        %1234 = vmatpush1.msra.mxu0 0.0
        %1235 = vmatprep.subr.mxu0 0.0
        %1236 = vmatpush1.msra.mxu0 0.0
        %1237 = vmatprep.subr.mxu0 0.0
        %1238 = vmatpush1.msra.mxu0 0.0
        %1239 = vmatprep.subr.mxu0 0.0
        %1240 = vmatpush1.msra.mxu0 0.0
        %1241 = vmatprep.subr.mxu0 0.0
        %1242 = vmatpush1.msra.mxu0 0.0
        %1243 = vmatprep.subr.mxu0 0.0
        %1244 = vmatpush1.msra.mxu0 0.0
        %1245 = vmatprep.subr.mxu0 0.0
        %1246 = vmatpush1.msra.mxu0 0.0
        %1247 = vmatprep.subr.mxu0 0.0
        %1248 = vmatpush1.msra.mxu0 0.0
        %1249 = vmatprep.subr.mxu0 0.0
        %1250 = vmatpush1.msra.mxu0 0.0
        %1251 = vmatprep.subr.mxu0 0.0
        %1252 = vmatpush1.msra.mxu0 0.0
        %1253 = vmatprep.subr.mxu0 0.0
        %1254 = vmatpush1.msra.mxu0 0.0
        %1255 = vmatprep.subr.mxu0 0.0
        %1256 = vmatpush1.msra.mxu0 0.0
        %1257 = vmatprep.subr.mxu0 0.0
        %1258 = vmatpush1.msra.mxu0 0.0
        %1259 = vmatprep.subr.mxu0 0.0
        %1260 = vmatpush1.msra.mxu0 0.0
        %1261 = vmatprep.subr.mxu0 0.0
        %1262 = vmatpush1.msra.mxu0 0.0
        %1263 = vmatprep.subr.mxu0 0.0
        %1264 = vmatpush1.msra.mxu0 0.0
        %1265 = vmatprep.subr.mxu0 0.0
        %1266 = vmatpush1.msra.mxu0 0.0
        %1267 = vmatprep.subr.mxu0 0.0
        %1268 = vmatpush1.msra.mxu0 0.0
        %1269 = vmatprep.subr.mxu0 0.0
        %1270 = vmatpush1.msra.mxu0 0.0
        %1271 = vmatprep.subr.mxu0 0.0
        %1272 = vmatpush1.msra.mxu0 0.0
        %1273 = vmatprep.subr.mxu0 0.0
        %1274 = vmatpush1.msra.mxu0 0.0
        %1275 = vmatprep.subr.mxu0 0.0
        %1276 = vmatpush1.msra.mxu0 0.0
        %1277 = vmatprep.subr.mxu0 0.0
        %1278 = vmatpush1.msra.mxu0 0.0
        %1279 = vmatprep.subr.mxu0 0.0
        %1280 = vmatpush1.msra.mxu0 0.0
        %1281 = vmatprep.subr.mxu0 0.0
        %1282 = vmatpush1.msra.mxu0 0.0
        %1283 = vmatprep.subr.mxu0 0.0
        %1284 = vmatpush1.msra.mxu0 0.0
        %1285 = vmatprep.subr.mxu0 0.0
        %1286 = vmatpush1.msra.mxu0 0.0
        %1287 = vmatprep.subr.mxu0 0.0
        %1288 = vmatpush1.msra.mxu0 0.0
        %1289 = vmatprep.mubr.f32.mxu0 0.0
        %v1290 = vand.u32 %v782, 4294901760
        %1291 = vmatmul.mubr.f32.gmra.mrb[0].mxu0 %v1290
        %v1292 = vpop.f32.mrb[0].mxu0
        %v1293 = vadd.f32 %v1213, %v1292
        %v1294 = vpop.f32.mrb[0].mxu0
        %1295 = vmatprep.mubr.f32.mxu0 0.0
        %v1296 = vand.u32 %v785, 4294901760
        %1297 = vmatmul.mubr.f32.gmra.mrb[0].mxu0 %v1296
        %v1298 = vpop.f32.mrb[0].mxu0
        %v1299 = vadd.f32 %v1219, %v1298
        %v1300 = vpop.f32.mrb[0].mxu0
        %1301 = vdwg.mxu0
        %1302 = vst.msk [vmem:[%s219] sm:$0xff] %vm227, %v1293
        %1303 = vst.msk [vmem:[%s219 + $0x8] sm:$0xff] %vm227, %v1299
        %s1304 = sand.u32 %s98, 1
        %s1305 = scalar_lea.sflag [#allocation4], %s1304
        %s1306 = sand.u32 %s98, 1
        %s1307 = smul.addr %s1306, 16
        %s1308 = scalar_lea.vmem [#allocation7], %s1307
        // Predicated region
        $region37: #{tpu_custom_call.1} parent=27 // pred_check
          %p1309 = pneg %p108
        $region38: #{tpu_custom_call.1} parent=27 // pred_check_branch
          %1311 = sbr.rel (%p1309) target = $region40
        $region39: #{tpu_custom_call.1} parent=27 // pred_region
          %s1312 = smul.u32 2, %s27
          %s1314 = ssub.s32 256, 256
          %1315 = vsyncadd %s1305, %s1314
          %s1316 = smul.addr %s26, 2
          %s1317 = sadd.s32 %s1312, %s1316
          %s1318 = smul.addr %s1317, 128
          %s1319 = scalar_lea.hbm %s2, %s1318
          %s1320 = sshll.u32 %s1308, 4
          %s1321 = int_to_ptr.vmem [resolvable:$true] %s1320
          %1326 = dma.vmem_to_hbm [thread:$0]  %s1321, 256, %s1319, %s1305, 128, 128, 8
        $region40: #{tpu_custom_call.1} parent=27 // pred_fallthru
          _
      $region28: #{tpu_custom_call.1} parent=5 // pred_fallthru
        _
      %p1327 = scmp.le.s32.totalorder 2, %s17
      // Predicated region
      $region41: #{tpu_custom_call.1} parent=5 // pred_check
        %p1328 = pneg %p1327
      $region42: #{tpu_custom_call.1} parent=5 // pred_check_branch
        %1330 = sbr.rel (%p1328) target = $region44
      $region43: #{tpu_custom_call.1} parent=5 // pred_region
        %s1331 = ssub.s32 %s17, 2
        // Predicated region
        $region45: #{tpu_custom_call.1} parent=43 // pred_check
          %p1332 = pneg %p114
        $region46: #{tpu_custom_call.1} parent=43 // pred_check_branch
          %1334 = sbr.rel (%p1332) target = $region48
        $region47: #{tpu_custom_call.1} parent=43 // pred_region
          %s1335 = sand.u32 %s99, 1
          %s1336 = scalar_lea.sflag [#allocation4], %s1335
          %s1337 = sand.u32 %s99, 1
          %s1338 = smul.addr %s1337, 16
          %s1339 = scalar_lea.vmem [#allocation7], %s1338
          %1340 = dma.done %s1336, 256
        $region48: #{tpu_custom_call.1} parent=43 // pred_fallthru
          _
      $region44: #{tpu_custom_call.1} parent=5 // pred_fallthru
        _
    $region6: #{tpu_custom_call.1} parent=1 // loop_footer
      %s21 = sadd.s32 1, %s17
    $region7: #{tpu_custom_call.1} parent=1 // loop_footer_branch
      %16 = sbr.rel target = $region3
    $region8: #{tpu_custom_call.1} parent=1 // loop_exit
      _
    %1341 = vsyncpa [#allocation3], 1
    %s1342 = scalar_lea.sflag [#allocation3], 1
    %1343 = vsyncpa %s1342, 1
    %1344 = vsyncpa [#allocation6], 1
    %s1345 = scalar_lea.sflag [#allocation6], 1
    %1346 = vsyncpa %s1345, 1
    %1347 = vsyncpa [#allocation4], 1
    %s1348 = scalar_lea.sflag [#allocation4], 1
    %1349 = vsyncpa %s1348, 1

</llo_original>
